<compile_context>
chip_gen: v6e
topology: v6e:2x2x1
jax: 0.10.0
libtpu: 0.0.40
codegen_flags: <defaults>
</compile_context>

<pallas_src>
import jax
import jax.numpy as jnp
from jax.experimental import pallas as pl
from jax.experimental.pallas import tpu as pltpu

_LANES = 128            # vreg lane width
_TM_MAX = 4096          # rows per tile: (4096,128) f32 = 2 MiB block
_SMALL_N = 1024         # below this, a single fused XLA op is faster


def _logreg_kernel(w_ref, b_ref, x_ref, o_ref):
    # w_ref, b_ref: (1,) f32 in SMEM (scalar path)
    # x_ref, o_ref: (tm, 128) f32 in VMEM (lane-dense tiles)
    w = w_ref[0]
    b = b_ref[0]
    z = x_ref[...] * w + b                               # VPU fma, no MXU
    o_ref[...] = (0.5 * jnp.tanh(0.5 * z) + 0.5).astype(o_ref.dtype)  # EUP


def _cdiv(a, b):
    return -(-a // b)


def _round_up(a, b):
    return _cdiv(a, b) * b


def logistic_regression(x, w, b, *, force_pallas=False):
    """x: (N, 1) f32, w: (1, 1) f32, b: (1,) f32 -> (N, 1) f32."""
    n = x.shape[0]
    w_scalar = w.reshape(()).astype(jnp.float32)
    b_scalar = b.reshape(()).astype(jnp.float32)

    # Tiny batches: pallas_call dispatch + repack would dwarf the compute.
    if n < _SMALL_N and not force_pallas:
        return jax.nn.sigmoid(x.astype(jnp.float32) * w_scalar + b_scalar)

    # Lane-dense view: (N, 1) -> (rows, 128).
    rows = _cdiv(n, _LANES)
    total = rows * _LANES
    ragged = total != n

    x_flat = x.reshape(-1).astype(jnp.float32)
    if ragged:
        # Only the tail needs padding; single extra pass, taken only when
        # N is not lane-aligned.
        x_flat = jnp.pad(x_flat, (0, total - n))
    x2d = x_flat.reshape(rows, _LANES)        # zero-copy bitcast when aligned

    # Tile selection: as large as possible (amortize per-step overhead) but
    # with >= 2 grid steps when the array is big enough, so both v7x
    # TensorCores get work. Partial last blocks are masked by Pallas.
    if rows < 16:
        tm = rows                             # single full-array block
    else:
        tm = min(_TM_MAX, _round_up(_cdiv(rows, 2), 8))
    grid = _cdiv(rows, tm)

    w_s = w.reshape(1).astype(jnp.float32)    # SMEM scalars
    b_s = b.reshape(1).astype(jnp.float32)

    out2d = pl.pallas_call(
        _logreg_kernel,
        out_shape=jax.ShapeDtypeStruct((rows, _LANES), jnp.float32),
        grid=(grid,),
        in_specs=[
            pl.BlockSpec(memory_space=pltpu.MemorySpace.SMEM),   # w
            pl.BlockSpec(memory_space=pltpu.MemorySpace.SMEM),   # b
            pl.BlockSpec((tm, _LANES), lambda i: (i, 0)),        # x tiles
        ],
        out_specs=pl.BlockSpec((tm, _LANES), lambda i: (i, 0)),
        compiler_params=pltpu.CompilerParams(
            dimension_semantics=("parallel",),
            vmem_limit_bytes=32 * 1024 * 1024,
        ),
    )(w_s, b_s, x2d)

    out_flat = out2d.reshape(-1)
    if ragged:
        out_flat = out_flat[:n]               # drop pad (only ragged path)
    return out_flat.reshape(n, 1)


if __name__ == "__main__":
    key = jax.random.PRNGKey(0)
    kx, kw, kb, kx2, kx3 = jax.random.split(key, 5)

    # Deterministic synthetic parameters (torch.nn.Linear(1, 1) shapes).
    w = jax.random.uniform(kw, (1, 1), jnp.float32, minval=-1.0, maxval=1.0)
    b = jax.random.uniform(kb, (1,), jnp.float32, minval=-1.0, maxval=1.0)

    def ref(xx):
        return jax.nn.sigmoid(xx @ w.T + b)

    # 1) Small batch (module's natural use) forced through the Pallas kernel.
    x_small = jax.random.normal(kx, (8, 1), jnp.float32)
    y_small = jax.block_until_ready(
        logistic_regression(x_small, w, b, force_pallas=True))
    assert y_small.shape == (8, 1)
    assert jnp.allclose(y_small, ref(x_small), atol=1e-6)

    # 2) Same small batch via the default dispatch (fused XLA fast path).
    y_small2 = jax.block_until_ready(logistic_regression(x_small, w, b))
    assert jnp.allclose(y_small2, ref(x_small), atol=1e-6)

    # 3) Ragged batch forced through Pallas (tail-padding path).
    x_rag = jax.random.normal(kx3, (300, 1), jnp.float32)
    y_rag = jax.block_until_ready(
        logistic_regression(x_rag, w, b, force_pallas=True))
    assert y_rag.shape == (300, 1)
    assert jnp.allclose(y_rag, ref(x_rag), atol=1e-6)

    # 4) Lane-aligned batch: zero-copy Pallas path, 2 parallel grid steps.
    x_big = jax.random.normal(kx2, (2048, 1), jnp.float32)
    y_big = jax.block_until_ready(logistic_regression(x_big, w, b))
    assert y_big.shape == (2048, 1)
    assert jnp.allclose(y_big, ref(x_big), atol=1e-6)

    print("KERNEL_OK")
</pallas_src>

<mosaic_0001>
module attributes {stable_mosaic.version = 11 : i64} {
  func.func @_logreg_kernel(%arg0: i32, %arg1: memref<1xf32, #tpu.memory_space<smem>>, %arg2: memref<1xf32, #tpu.memory_space<smem>>, %arg3: memref<1x128xf32, #tpu.memory_space<vmem>>, %arg4: memref<1x128xf32, #tpu.memory_space<vmem>>) attributes {dimension_semantics = [#tpu.dimension_semantics<parallel>], iteration_bounds = array<i64: 1>, scalar_prefetch = 0 : i64, scratch_operands = 0 : i64, tpu.core_type = #tpu.core_type<tc>, window_params = [{transform_indices = @transform_0, window_bounds = array<i64: 1>}, {transform_indices = @transform_1, window_bounds = array<i64: 1>}, {transform_indices = @transform_2, window_bounds = array<i64: 1, 128>}, {transform_indices = @transform_3, window_bounds = array<i64: 1, 128>}]} {
    %c0 = arith.constant 0 : index
    %0 = memref.load %arg1[%c0] : memref<1xf32, #tpu.memory_space<smem>>
    %c0_0 = arith.constant 0 : index
    %1 = memref.load %arg2[%c0_0] : memref<1xf32, #tpu.memory_space<smem>>
    %c0_1 = arith.constant 0 : index
    %c0_2 = arith.constant 0 : index
    %2 = vector.load %arg3[%c0_1, %c0_2] : memref<1x128xf32, #tpu.memory_space<vmem>>, vector<1x128xf32>
    %3 = vector.broadcast %0 : f32 to vector<1x128xf32>
    %4 = arith.mulf %2, %3 : vector<1x128xf32>
    %5 = vector.broadcast %1 : f32 to vector<1x128xf32>
    %6 = arith.addf %4, %5 : vector<1x128xf32>
    %cst = arith.constant 5.000000e-01 : f32
    %7 = vector.broadcast %cst : f32 to vector<1x128xf32>
    %8 = arith.mulf %7, %6 : vector<1x128xf32>
    %9 = math.tanh %8 : vector<1x128xf32>
    %cst_3 = arith.constant 5.000000e-01 : f32
    %10 = vector.broadcast %cst_3 : f32 to vector<1x128xf32>
    %11 = arith.mulf %10, %9 : vector<1x128xf32>
    %cst_4 = arith.constant 5.000000e-01 : f32
    %12 = vector.broadcast %cst_4 : f32 to vector<1x128xf32>
    %13 = arith.addf %11, %12 : vector<1x128xf32>
    %c0_5 = arith.constant 0 : index
    %c0_6 = arith.constant 0 : index
    %14 = vector.load %arg4[%c0_5, %c0_6] : memref<1x128xf32, #tpu.memory_space<vmem>>, vector<1x128xf32>
    tpu.vector_store %arg4[%c0_5, %c0_6], %13 {strides = array<i32>} : memref<1x128xf32, #tpu.memory_space<vmem>>, vector<1x128xf32>,
    return
  }
  func.func @transform_0(%arg0: i32) -> i32 {
    %c0_i32 = arith.constant 0 : i32
    %c0_i32_0 = arith.constant 0 : i32
    return %c0_i32 : i32
  }
  func.func @transform_1(%arg0: i32) -> i32 {
    %c0_i32 = arith.constant 0 : i32
    %c0_i32_0 = arith.constant 0 : i32
    return %c0_i32 : i32
  }
  func.func @transform_2(%arg0: i32) -> (i32, i32) {
    %c0_i32 = arith.constant 0 : i32
    %c0_i32_0 = arith.constant 0 : i32
    return %arg0, %c0_i32 : i32, i32
  }
  func.func @transform_3(%arg0: i32) -> (i32, i32) {
    %c0_i32 = arith.constant 0 : i32
    %c0_i32_0 = arith.constant 0 : i32
    return %arg0, %c0_i32 : i32, i32
  }
}

</mosaic_0001>

<llo_original>
// kernel: tpu_custom_call.1
$region0: #{tpu_custom_call.1}
  #allocation0 [shape = 'u32[]', space=smem, size = 0x4, offset = 0x4, fixed_abs, tag = 'smem constant byte address 0x4 - core index']
  #allocation1 [shape = 'u32[144,128]{1,0:T(1,128)}', space=vmem, size = 0x12000, scoped, tag = 'internal scratch']
  #allocation2 [shape = 'f32[1]{0:T(128)S(6)}', space=smem, size = 0x200, scoped, tag = 'scoped memory for tpu_custom_call.1']
  #allocation3 [shape = 'f32[1]{0:T(128)S(6)}', space=smem, size = 0x200, scoped, tag = 'scoped memory for tpu_custom_call.1']
  %s0 = inlined_call_operand.<no memory space> [shape: f32[1], index: 0, kind: input, shape index: {}]
  %s1 = inlined_call_operand.<no memory space> [shape: f32[1], index: 1, kind: input, shape index: {}]
  %s2 = inlined_call_operand.vmem [shape: f32[1,128], index: 2, kind: input, shape index: {}]
  %s3 = inlined_call_operand.hbm [shape: f32[1,128], index: 3, kind: output, shape index: {}]
  %s4 = sld [smem:[#allocation0]]
  $region22: #{tpu_custom_call.1} parent=0
    _
  %s6 = ssub.s32 1, %s4
  %s7 = scalar_select 0, %s6, %s4
  %8 = sst [smem:[#allocation2]] %s0
  %9 = sst [smem:[#allocation3]] %s1
  $region1: #{tpu_custom_call.1} parent=0
    #allocation4 [shape = 'u8[512]{0}', space=vmem, size = 0x400, scoped, tag = 'output window, operand 0, single buffered']
    #allocation5 [shape = 's32[1]{0}', space=sflag, size = 0x4, scoped, tag = 'scoped memory for tpu_custom_call.1']
    %10 = vsyncpa [#allocation5], 0
    // Predicated region
    $region2: #{tpu_custom_call.1} parent=1 // pred_check
      _
    $region3: #{tpu_custom_call.1} parent=1 // pred_check_branch
      %12 = sbr.rel (0) target = $region5
    $region4: #{tpu_custom_call.1} parent=1 // pred_region
      _
    $region5: #{tpu_custom_call.1} parent=1 // pred_fallthru
      _
    // Predicated region
    $region6: #{tpu_custom_call.1} parent=1 // pred_check
      _
    $region7: #{tpu_custom_call.1} parent=1 // pred_check_branch
      %14 = sbr.rel (0) target = $region9
    $region8: #{tpu_custom_call.1} parent=1 // pred_region
      _
    $region9: #{tpu_custom_call.1} parent=1 // pred_fallthru
      _
    // Predicated region
    $region10: #{tpu_custom_call.1} parent=1 // pred_check
      _
    $region11: #{tpu_custom_call.1} parent=1 // pred_check_branch
      %16 = sbr.rel (0) target = $region13
    $region12: #{tpu_custom_call.1} parent=1 // pred_region
      _
    $region13: #{tpu_custom_call.1} parent=1 // pred_fallthru
      _
    %s17 = sld [smem:[#allocation2]]
    %s18 = sld [smem:[#allocation3]]
    %v19 = vld [vmem:[%s2] sm:$0x1]
    %v20 = vstv %s17
    %v21 = vmul.f32 %v19, %v20
    %v22 = vstv %s18
    %v23 = vadd.f32 %v21, %v22
    %v24 = vmul.f32 %v23, 0.5
    %v25 = vtanh.pop %v24
    %v26 = vmul.f32 %v25, 0.5
    %v27 = vadd.f32 %v26, 0.5
    %28 = vst [vmem:[#allocation4] sm:$0x1] %v27
    // Predicated region
    $region14: #{tpu_custom_call.1} parent=1 // pred_check
      _
    $region15: #{tpu_custom_call.1} parent=1 // pred_check_branch
      %30 = sbr.rel (0) target = $region17
    $region16: #{tpu_custom_call.1} parent=1 // pred_region
      %s32 = ssub.s32 16, 16
      %33 = vsyncadd [#allocation5], %s32
      %s35 = sshll.u32 [#allocation4], 4
      %s36 = int_to_ptr.vmem [resolvable:$true] %s35
      %38 = dma.vmem_to_hbm [thread:$0]  %s36, 16, %s3, [#allocation5]
    $region17: #{tpu_custom_call.1} parent=1 // pred_fallthru
      _
    // Predicated region
    $region18: #{tpu_custom_call.1} parent=1 // pred_check
      _
    $region19: #{tpu_custom_call.1} parent=1 // pred_check_branch
      %40 = sbr.rel (0) target = $region21
    $region20: #{tpu_custom_call.1} parent=1 // pred_region
      %41 = dma.done [#allocation5], 16
    $region21: #{tpu_custom_call.1} parent=1 // pred_fallthru
      _
    %42 = vsyncpa [#allocation5], 1

</llo_original>
